<compile_context>
chip_gen: v5e
topology: v5e:2x2
jax: 0.10.0
libtpu: 0.0.40
codegen_flags: <defaults>
</compile_context>

<pallas_src>
import functools

import jax
import jax.numpy as jnp
from jax.experimental import pallas as pl
from jax.experimental.pallas import tpu as pltpu

# ---------------- config (small synthetic shapes consistent with the module) --
INPUT_RES = (32, 32)        # (height, width)  -- module's input_resolution
NUM_POINTS = 16             # module default 256; small demo size
NUM_PIPS_ITER = 2
NUM_MIXER_BLOCKS = 2        # real TAPIR has 12; shape convention preserved
FEAT_DIM = 256              # matches query_feats (1, N, 256)
HIRES_DIM = 128             # matches hires_query_feats (1, N, 128)
STRIDE_LO = 8               # lowres feature stride
STRIDE_HI = 4               # hires feature stride
CAUSAL_DIM = 512 + 2048     # 2560, module's hard-coded causal state channels
OUT_LANES = 128             # lane-dense packed track-head output width


# ================================ Pallas kernels ==============================

def _backbone_kernel(p8_ref, p4_ref, wlo_ref, blo_ref, whi_ref, bhi_ref,
                     feat_ref, hires_ref):
    """Fused lowres + hires patch-conv.  Pixel normalization is folded into
    (W', b') in the wrapper, so this is just: l2norm(relu(x @ W' + b'))."""
    def branch(p_ref, w_ref, b_ref, o_ref):
        y = jnp.dot(p_ref[...], w_ref[...], preferred_element_type=jnp.float32)
        y = jnp.maximum(y + b_ref[...], 0.0)
        inv = jax.lax.rsqrt(jnp.sum(y * y, axis=-1, keepdims=True) + 1e-12)
        o_ref[...] = (y * inv).astype(o_ref.dtype)

    branch(p8_ref, wlo_ref, blo_ref, feat_ref)
    branch(p4_ref, whi_ref, bhi_ref, hires_ref)


def backbone_features(p8, p4, params, *, tm_lo=None):
    """p8: (S_lo, 192), p4: (S_hi, 48) bf16 im2col patches -> l2-normalized
    bf16 feature rows (S_lo, 256) and (S_hi, 128)."""
    S_lo, p_lo = p8.shape
    S_hi, p_hi = p4.shape
    r2 = S_hi // S_lo
    if tm_lo is None:
        tm_lo = min(S_lo, 256)          # row tile (multiple of 8 at real sizes)
    assert S_lo % tm_lo == 0
    tm_hi = tm_lo * r2
    return pl.pallas_call(
        _backbone_kernel,
        out_shape=(jax.ShapeDtypeStruct((S_lo, FEAT_DIM), jnp.bfloat16),
                   jax.ShapeDtypeStruct((S_hi, HIRES_DIM), jnp.bfloat16)),
        grid=(S_lo // tm_lo,),
        in_specs=[
            pl.BlockSpec((tm_lo, p_lo), lambda i: (i, 0)),
            pl.BlockSpec((tm_hi, p_hi), lambda i: (i, 0)),
            pl.BlockSpec((p_lo, FEAT_DIM), lambda i: (0, 0)),
            pl.BlockSpec((1, FEAT_DIM), lambda i: (0, 0)),
            pl.BlockSpec((p_hi, HIRES_DIM), lambda i: (0, 0)),
            pl.BlockSpec((1, HIRES_DIM), lambda i: (0, 0)),
        ],
        out_specs=(pl.BlockSpec((tm_lo, FEAT_DIM), lambda i: (i, 0)),
                   pl.BlockSpec((tm_hi, HIRES_DIM), lambda i: (i, 0))),
        compiler_params=pltpu.CompilerParams(
            dimension_semantics=("parallel",)),
    )(p8, p4, params["w_lo"], params["b_lo"], params["w_hi"], params["b_hi"])


def _corr_trackhead_kernel(params_ref, qcat_ref, fcatT_ref, m_ref, out_ref,
                           *, inv_S):
    """Fused: combined cost volume (lowres + pooled-hires) as ONE bf16 matmul
    against a pre-transposed feature slab, soft-argmax (moments via a small
    MXU matmul), occlusion / expected-dist heads, visibility, track rescale
    and the per-point causal gate.  Output packed lane-dense (tn, 128):
      lane 0: x, 1: y, 2: occ logit, 3: exp-dist logit, 4: vis prob, 5: gate.
    """
    q = qcat_ref[...]                         # (tn, C+Ch) bf16
    fT = fcatT_ref[...]                       # (C+Ch, S_lo) bf16
    combined = jnp.dot(q, fT, preferred_element_type=jnp.float32)   # (tn,S_lo)

    # stable soft-argmax: moments [sum(e*cx), sum(e*cy), sum(e)] via the MXU
    mx = jnp.max(combined, axis=-1, keepdims=True)
    e = jnp.exp(combined - mx)
    mom = jnp.dot(e.astype(jnp.bfloat16), m_ref[...],
                  preferred_element_type=jnp.float32)               # (tn, 8)
    inv_sum = pl.reciprocal(mom[:, 2:3], approx=True)
    tx = mom[:, 0:1] * inv_sum * params_ref[4]   # rescaled x
    ty = mom[:, 1:2] * inv_sum * params_ref[5]   # rescaled y

    mean = jnp.sum(combined, axis=-1, keepdims=True) * inv_S
    occ = params_ref[0] * mx + params_ref[1]
    expd = params_ref[2] * mean + params_ref[3]
    vis = (1.0 - jax.nn.sigmoid(occ)) * (1.0 - jax.nn.sigmoid(expd))

    lane = jax.lax.broadcasted_iota(jnp.int32, out_ref.shape, 1)
    out = jnp.zeros(out_ref.shape, jnp.float32)
    for ln, col in enumerate((tx, ty, occ, expd, vis, mean)):
        out = out + jnp.where(lane == ln, col, 0.0)
    out_ref[...] = out


def correlation_track_head(head_params, qcat, fcatT, moment_m, *, tn=None):
    """qcat: (N, C+Ch) bf16, fcatT: (C+Ch, S_lo) bf16 (pooled + transposed in
    the wrapper), moment_m: (S_lo, 8) bf16 constant [cx, cy, 1, 0...]."""
    N, K = qcat.shape
    _, S_lo = fcatT.shape
    if tn is None:
        tn = min(N, 128)      # >=2 grid steps at N=256 -> both v7x TCs busy
    assert N % tn == 0
    kern = functools.partial(_corr_trackhead_kernel, inv_S=1.0 / float(S_lo))
    return pl.pallas_call(
        kern,
        out_shape=jax.ShapeDtypeStruct((N, OUT_LANES), jnp.float32),
        grid=(N // tn,),
        in_specs=[
            pl.BlockSpec(memory_space=pltpu.MemorySpace.SMEM),   # (8,) scalars
            pl.BlockSpec((tn, K), lambda i: (i, 0)),
            pl.BlockSpec((K, S_lo), lambda i: (0, 0)),
            pl.BlockSpec((S_lo, 8), lambda i: (0, 0)),
        ],
        out_specs=pl.BlockSpec((tn, OUT_LANES), lambda i: (i, 0)),
        compiler_params=pltpu.CompilerParams(
            dimension_semantics=("parallel",),
            vmem_limit_bytes=32 * 1024 * 1024),
    )(head_params, qcat, fcatT, moment_m)


def _causal_update_kernel(gate_ref, old_ref, new_ref, *, n_block):
    # gated tanh memory update (stand-in for the PIPs mixer causal context);
    # per-point gate read as a scalar from SMEM (free broadcast), several
    # points per grid step, full D per block.
    base = pl.program_id(0) * n_block
    for j in range(n_block):                       # static, unrolled
        g = gate_ref[base + j]
        x = old_ref[:, j:j + 1, :, :].astype(jnp.float32)
        new_ref[:, j:j + 1, :, :] = jnp.tanh(0.9 * x + 0.1 * g).astype(
            new_ref.dtype)


def causal_update(causal_state, point_gate, *, n_block=8):
    """causal_state: (P, B, N, 2, D) bf16; point_gate: (N,) f32 per-point gate.
    Grid = (N // n_block,); each step touches (P*B, n_block, 2, D) and the
    state is aliased in place (no second 250 MiB HBM buffer at real shapes).

    TODO(synk): the module declares the causal state as float32; it is stored
    and streamed in bf16 here since the update kernel is purely HBM-bound."""
    P, B, N, T, D = causal_state.shape
    n_block = min(n_block, N)
    assert N % n_block == 0
    flat = causal_state.reshape(P * B, N, T, D)      # free major-dim merge
    kern = functools.partial(_causal_update_kernel, n_block=n_block)
    out = pl.pallas_call(
        kern,
        out_shape=jax.ShapeDtypeStruct(flat.shape, flat.dtype),
        grid=(N // n_block,),
        in_specs=[
            pl.BlockSpec(memory_space=pltpu.MemorySpace.SMEM),   # (N,) gate
            pl.BlockSpec((P * B, n_block, T, D), lambda i: (0, i, 0, 0)),
        ],
        out_specs=pl.BlockSpec((P * B, n_block, T, D), lambda i: (0, i, 0, 0)),
        input_output_aliases={1: 0},
        compiler_params=pltpu.CompilerParams(
            dimension_semantics=("parallel",),
            vmem_limit_bytes=32 * 1024 * 1024),
    )(point_gate, flat)
    return out.reshape(P, B, N, T, D)


# ================================ JAX glue ====================================

def init_params(key):
    """Patch-conv weights with the pixel normalization (x*2/255 - 1) folded in:
    (x*s + c) @ W + b  ==  x @ (s*W) + (b + c*sum(W, axis=0))."""
    k = jax.random.split(key, 5)
    p_lo = STRIDE_LO * STRIDE_LO * 3
    p_hi = STRIDE_HI * STRIDE_HI * 3
    s, c = 2.0 / 255.0, -1.0

    w_lo = jax.random.normal(k[0], (p_lo, FEAT_DIM), jnp.float32) / jnp.sqrt(p_lo)
    b_lo = jnp.zeros((1, FEAT_DIM), jnp.float32)
    w_hi = jax.random.normal(k[1], (p_hi, HIRES_DIM), jnp.float32) / jnp.sqrt(p_hi)
    b_hi = jnp.zeros((1, HIRES_DIM), jnp.float32)

    return {
        "w_lo": (s * w_lo).astype(jnp.bfloat16),
        "b_lo": b_lo + c * jnp.sum(w_lo, axis=0, keepdims=True),
        "w_hi": (s * w_hi).astype(jnp.bfloat16),
        "b_hi": b_hi + c * jnp.sum(w_hi, axis=0, keepdims=True),
        # [w_occ, b_occ, w_dist, b_dist] for the occlusion / expected-dist heads
        "head": jnp.array([1.5, -0.2, 1.0, -0.3], jnp.float32),
    }


def extract_patches(x, patch):
    """(H, W, 3) pixels -> (H/p * W/p, p*p*3) bf16 im2col (0..255 exact)."""
    H, W, C = x.shape
    x = x.reshape(H // patch, patch, W // patch, patch, C)
    x = x.transpose(0, 2, 1, 3, 4)
    return x.reshape((H // patch) * (W // patch), patch * patch * C).astype(
        jnp.bfloat16)


def pool_concat_transpose(feat_flat, hires_flat, H8, W8, r):
    """Pool hires features 2x2 (exactly equivalent to pooling the hires cost
    volume, since the query vector is constant over each window), concat with
    lowres features and pre-transpose so the corr kernel is one plain matmul."""
    Ch = hires_flat.shape[-1]
    h = hires_flat.reshape(H8, r, W8, r, Ch).astype(jnp.float32)
    pooled = h.mean(axis=(1, 3)).reshape(H8 * W8, Ch).astype(jnp.bfloat16)
    fcat = jnp.concatenate([feat_flat, pooled], axis=-1)     # (S_lo, C+Ch)
    return fcat.T                                            # (C+Ch, S_lo)


def build_moment_matrix(H8, W8, stride_lo):
    """Constant (S_lo, 8) bf16 matrix [cx, cy, 1, 0...]: soft-argmax moments
    become one small MXU matmul instead of several XLU reductions."""
    S_lo = H8 * W8
    idx = jnp.arange(S_lo)
    cx = ((idx % W8).astype(jnp.float32) + 0.5) * stride_lo
    cy = ((idx // W8).astype(jnp.float32) + 0.5) * stride_lo
    ones = jnp.ones((S_lo, 1), jnp.float32)
    zeros = jnp.zeros((S_lo, 5), jnp.float32)
    m = jnp.concatenate([cx[:, None], cy[:, None], ones, zeros], axis=1)
    return m.astype(jnp.bfloat16)


def get_feature_grids(frame, params):
    """frame: (H, W, 3) raw pixels in [0, 255]. Returns NHWC bf16 grids."""
    p8 = extract_patches(frame, STRIDE_LO)
    p4 = extract_patches(frame, STRIDE_HI)
    feat, hires = backbone_features(p8, p4, params)
    H8, W8 = INPUT_RES[0] // STRIDE_LO, INPUT_RES[1] // STRIDE_LO
    H4, W4 = INPUT_RES[0] // STRIDE_HI, INPUT_RES[1] // STRIDE_HI
    return (feat.reshape(1, H8, W8, FEAT_DIM),
            hires.reshape(1, H4, W4, HIRES_DIM))


def get_query_features(query_points_norm, feature_grid, hires_grid):
    """query_points_norm: (1, N, 2) with (x, y) in [0, 1). Encoder path."""
    # TODO(synk): real TAPIR uses bilinear interpolation (map_coordinates);
    # nearest-neighbour sampling here (gather glue, not a hot path).
    _, Hl, Wl, _ = feature_grid.shape
    _, Hh, Wh, _ = hires_grid.shape
    x = query_points_norm[0, :, 0]
    y = query_points_norm[0, :, 1]
    xi_l = jnp.clip(jnp.floor(x * Wl).astype(jnp.int32), 0, Wl - 1)
    yi_l = jnp.clip(jnp.floor(y * Hl).astype(jnp.int32), 0, Hl - 1)
    xi_h = jnp.clip(jnp.floor(x * Wh).astype(jnp.int32), 0, Wh - 1)
    yi_h = jnp.clip(jnp.floor(y * Hh).astype(jnp.int32), 0, Hh - 1)
    qf = feature_grid[0, yi_l, xi_l]     # (N, 256) bf16
    hqf = hires_grid[0, yi_h, xi_h]      # (N, 128) bf16
    return qf[None], hqf[None]


def tapir_inference_forward(frame, query_feats, hires_query_feats,
                            causal_state, params):
    """Mirrors TapirInference.forward: frame -> (tracks, visibles) and updates
    the causal state."""
    height, width = frame.shape[:2]
    H8, W8 = INPUT_RES[0] // STRIDE_LO, INPUT_RES[1] // STRIDE_LO
    r = STRIDE_LO // STRIDE_HI

    # --- TapirPredictor.get_feature_grids (fused Pallas backbone) -------------
    p8 = extract_patches(frame, STRIDE_LO)
    p4 = extract_patches(frame, STRIDE_HI)
    feat_flat, hires_flat = backbone_features(p8, p4, params)   # bf16 rows

    # --- once-per-frame XLA glue: feature-level pooling, concat, transpose ----
    fcatT = pool_concat_transpose(feat_flat, hires_flat, H8, W8, r)
    qcat = jnp.concatenate([query_feats[0], hires_query_feats[0]],
                           axis=-1).astype(jnp.bfloat16)        # (N, 384)
    moment_m = build_moment_matrix(H8, W8, float(STRIDE_LO))

    # --- fused correlation + track head + visibility + gate -------------------
    scale = jnp.array([width / INPUT_RES[1], height / INPUT_RES[0]], jnp.float32)
    head_full = jnp.concatenate(
        [params["head"], scale, jnp.zeros((2,), jnp.float32)])      # (8,) SMEM
    packed = correlation_track_head(head_full, qcat, fcatT, moment_m)

    tracks = packed[:, 0:2]              # already rescaled to original frame
    visibles = packed[:, 4] > 0.5        # postprocess_occlusions
    point_gate = packed[:, 5]            # per-point causal gate (mean cost)

    # --- causal context update (PIPs mixer memory, simplified) ----------------
    new_causal_state = causal_update(causal_state, point_gate)
    return tracks, visibles, new_causal_state


# ================================== main ======================================

if __name__ == "__main__":
    key = jax.random.PRNGKey(0)
    k_frame, k_pts = jax.random.split(key, 2)

    # synthetic frame (already at input_resolution) and query points in pixels
    frame = jax.random.randint(
        k_frame, (INPUT_RES[0], INPUT_RES[1], 3), 0, 256).astype(jnp.float32)
    query_points = jax.random.uniform(
        k_pts, (NUM_POINTS, 2), minval=0.0,
        maxval=float(min(INPUT_RES)))                                 # (x, y)

    params = init_params(jax.random.PRNGKey(42))

    # ---- set_points: encode query features from the first frame --------------
    feature_grid, hires_grid = get_feature_grids(frame, params)
    qp_norm = jnp.stack([query_points[:, 0] / INPUT_RES[1],
                         query_points[:, 1] / INPUT_RES[0]], axis=-1)
    query_feats, hires_query_feats = get_query_features(
        qp_norm[None], feature_grid, hires_grid)
    causal_state = jnp.zeros(
        (NUM_PIPS_ITER, NUM_MIXER_BLOCKS, NUM_POINTS, 2, CAUSAL_DIM),
        jnp.bfloat16)

    # ---- forward --------------------------------------------------------------
    forward_fn = jax.jit(tapir_inference_forward)
    tracks, visibles, causal_state = forward_fn(
        frame, query_feats, hires_query_feats, causal_state, params)
    jax.block_until_ready((tracks, visibles, causal_state))

    assert tracks.shape == (NUM_POINTS, 2)
    assert visibles.shape == (NUM_POINTS,)
    assert causal_state.shape == (NUM_PIPS_ITER, NUM_MIXER_BLOCKS,
                                  NUM_POINTS, 2, CAUSAL_DIM)
    assert bool(jnp.all(jnp.isfinite(tracks)))
    assert bool(jnp.all(jnp.isfinite(causal_state.astype(jnp.float32))))
    print("KERNEL_OK")
</pallas_src>

<mosaic_0001>
module attributes {stable_mosaic.version = 11 : i64} {
  func.func @_backbone_kernel(%arg0: i32, %arg1: memref<16x192xbf16, #tpu.memory_space<vmem>>, %arg2: memref<64x48xbf16, #tpu.memory_space<vmem>>, %arg3: memref<192x256xbf16, #tpu.memory_space<vmem>>, %arg4: memref<1x256xf32, #tpu.memory_space<vmem>>, %arg5: memref<48x128xbf16, #tpu.memory_space<vmem>>, %arg6: memref<1x128xf32, #tpu.memory_space<vmem>>, %arg7: memref<16x256xbf16, #tpu.memory_space<vmem>>, %arg8: memref<64x128xbf16, #tpu.memory_space<vmem>>) attributes {dimension_semantics = [#tpu.dimension_semantics<parallel>], iteration_bounds = array<i64: 1>, scalar_prefetch = 0 : i64, scratch_operands = 0 : i64, tpu.core_type = #tpu.core_type<tc>, window_params = [{transform_indices = @transform_0, window_bounds = array<i64: 16, 192>}, {transform_indices = @transform_1, window_bounds = array<i64: 64, 48>}, {pipeline_mode = #tpu.pipeline_mode<synchronous>, transform_indices = @transform_2, window_bounds = array<i64: 192, 256>}, {pipeline_mode = #tpu.pipeline_mode<synchronous>, transform_indices = @transform_3, window_bounds = array<i64: 1, 256>}, {pipeline_mode = #tpu.pipeline_mode<synchronous>, transform_indices = @transform_4, window_bounds = array<i64: 48, 128>}, {pipeline_mode = #tpu.pipeline_mode<synchronous>, transform_indices = @transform_5, window_bounds = array<i64: 1, 128>}, {transform_indices = @transform_6, window_bounds = array<i64: 16, 256>}, {transform_indices = @transform_7, window_bounds = array<i64: 64, 128>}]} {
    %c0 = arith.constant 0 : index
    %c0_0 = arith.constant 0 : index
    %0 = vector.load %arg1[%c0, %c0_0] : memref<16x192xbf16, #tpu.memory_space<vmem>>, vector<16x192xbf16>
    %c0_1 = arith.constant 0 : index
    %c0_2 = arith.constant 0 : index
    %1 = vector.load %arg3[%c0_1, %c0_2] : memref<192x256xbf16, #tpu.memory_space<vmem>>, vector<192x256xbf16>
    %cst = arith.constant dense<0.000000e+00> : vector<16x256xf32>
    %2 = tpu.matmul %0, %1, %cst {dimension_numbers = #tpu.dot_dimension_numbers<[1], [0], [0], [1], [0, 0, 1, 1], [], []>} : vector<16x192xbf16>, vector<192x256xbf16>, vector<16x256xf32> -> vector<16x256xf32>
    %c0_3 = arith.constant 0 : index
    %c0_4 = arith.constant 0 : index
    %3 = vector.load %arg4[%c0_3, %c0_4] : memref<1x256xf32, #tpu.memory_space<vmem>>, vector<1x256xf32>
    %4 = vector.broadcast %3 : vector<1x256xf32> to vector<16x256xf32>
    %5 = arith.addf %2, %4 : vector<16x256xf32>
    %cst_5 = arith.constant 0.000000e+00 : f32
    %6 = vector.broadcast %cst_5 : f32 to vector<16x256xf32>
    %7 = arith.maximumf %5, %6 : vector<16x256xf32>
    %8 = arith.mulf %7, %7 : vector<16x256xf32>
    %cst_6 = arith.constant dense<0.000000e+00> : vector<16xf32>
    %9 = vector.multi_reduction <add>, %8, %cst_6 [1] : vector<16x256xf32> to vector<16xf32>
    %10 = vector.shape_cast %9 : vector<16xf32> to vector<16x1xf32>
    %cst_7 = arith.constant 9.99999996E-13 : f32
    %11 = vector.broadcast %cst_7 : f32 to vector<16x1xf32>
    %12 = arith.addf %10, %11 : vector<16x1xf32>
    %13 = math.rsqrt %12 : vector<16x1xf32>
    %14 = vector.broadcast %13 : vector<16x1xf32> to vector<16x256xf32>
    %15 = arith.mulf %7, %14 : vector<16x256xf32>
    %16 = arith.truncf %15 : vector<16x256xf32> to vector<16x256xbf16>
    %c0_8 = arith.constant 0 : index
    %c0_9 = arith.constant 0 : index
    %17 = vector.load %arg7[%c0_8, %c0_9] : memref<16x256xbf16, #tpu.memory_space<vmem>>, vector<16x256xbf16>
    tpu.vector_store %arg7[%c0_8, %c0_9], %16 {strides = array<i32>} : memref<16x256xbf16, #tpu.memory_space<vmem>>, vector<16x256xbf16>,
    %c0_10 = arith.constant 0 : index
    %c0_11 = arith.constant 0 : index
    %18 = vector.load %arg2[%c0_10, %c0_11] : memref<64x48xbf16, #tpu.memory_space<vmem>>, vector<64x48xbf16>
    %c0_12 = arith.constant 0 : index
    %c0_13 = arith.constant 0 : index
    %19 = vector.load %arg5[%c0_12, %c0_13] : memref<48x128xbf16, #tpu.memory_space<vmem>>, vector<48x128xbf16>
    %cst_14 = arith.constant dense<0.000000e+00> : vector<64x128xf32>
    %20 = tpu.matmul %18, %19, %cst_14 {dimension_numbers = #tpu.dot_dimension_numbers<[1], [0], [0], [1], [0, 0, 1, 1], [], []>} : vector<64x48xbf16>, vector<48x128xbf16>, vector<64x128xf32> -> vector<64x128xf32>
    %c0_15 = arith.constant 0 : index
    %c0_16 = arith.constant 0 : index
    %21 = vector.load %arg6[%c0_15, %c0_16] : memref<1x128xf32, #tpu.memory_space<vmem>>, vector<1x128xf32>
    %22 = vector.broadcast %21 : vector<1x128xf32> to vector<64x128xf32>
    %23 = arith.addf %20, %22 : vector<64x128xf32>
    %cst_17 = arith.constant 0.000000e+00 : f32
    %24 = vector.broadcast %cst_17 : f32 to vector<64x128xf32>
    %25 = arith.maximumf %23, %24 : vector<64x128xf32>
    %26 = arith.mulf %25, %25 : vector<64x128xf32>
    %cst_18 = arith.constant dense<0.000000e+00> : vector<64xf32>
    %27 = vector.multi_reduction <add>, %26, %cst_18 [1] : vector<64x128xf32> to vector<64xf32>
    %28 = vector.shape_cast %27 : vector<64xf32> to vector<64x1xf32>
    %cst_19 = arith.constant 9.99999996E-13 : f32
    %29 = vector.broadcast %cst_19 : f32 to vector<64x1xf32>
    %30 = arith.addf %28, %29 : vector<64x1xf32>
    %31 = math.rsqrt %30 : vector<64x1xf32>
    %32 = vector.broadcast %31 : vector<64x1xf32> to vector<64x128xf32>
    %33 = arith.mulf %25, %32 : vector<64x128xf32>
    %34 = arith.truncf %33 : vector<64x128xf32> to vector<64x128xbf16>
    %c0_20 = arith.constant 0 : index
    %c0_21 = arith.constant 0 : index
    %35 = vector.load %arg8[%c0_20, %c0_21] : memref<64x128xbf16, #tpu.memory_space<vmem>>, vector<64x128xbf16>
    tpu.vector_store %arg8[%c0_20, %c0_21], %34 {strides = array<i32>} : memref<64x128xbf16, #tpu.memory_space<vmem>>, vector<64x128xbf16>,
    return
  }
  func.func @transform_0(%arg0: i32) -> (i32, i32) {
    %c0_i32 = arith.constant 0 : i32
    %c0_i32_0 = arith.constant 0 : i32
    return %arg0, %c0_i32 : i32, i32
  }
  func.func @transform_1(%arg0: i32) -> (i32, i32) {
    %c0_i32 = arith.constant 0 : i32
    %c0_i32_0 = arith.constant 0 : i32
    return %arg0, %c0_i32 : i32, i32
  }
  func.func @transform_2(%arg0: i32) -> (i32, i32) {
    %c0_i32 = arith.constant 0 : i32
    %c0_i32_0 = arith.constant 0 : i32
    %c0_i32_1 = arith.constant 0 : i32
    return %c0_i32, %c0_i32_0 : i32, i32
  }
  func.func @transform_3(%arg0: i32) -> (i32, i32) {
    %c0_i32 = arith.constant 0 : i32
    %c0_i32_0 = arith.constant 0 : i32
    %c0_i32_1 = arith.constant 0 : i32
    return %c0_i32, %c0_i32_0 : i32, i32
  }
  func.func @transform_4(%arg0: i32) -> (i32, i32) {
    %c0_i32 = arith.constant 0 : i32
    %c0_i32_0 = arith.constant 0 : i32
    %c0_i32_1 = arith.constant 0 : i32
    return %c0_i32, %c0_i32_0 : i32, i32
  }
  func.func @transform_5(%arg0: i32) -> (i32, i32) {
    %c0_i32 = arith.constant 0 : i32
    %c0_i32_0 = arith.constant 0 : i32
    %c0_i32_1 = arith.constant 0 : i32
    return %c0_i32, %c0_i32_0 : i32, i32
  }
  func.func @transform_6(%arg0: i32) -> (i32, i32) {
    %c0_i32 = arith.constant 0 : i32
    %c0_i32_0 = arith.constant 0 : i32
    return %arg0, %c0_i32 : i32, i32
  }
  func.func @transform_7(%arg0: i32) -> (i32, i32) {
    %c0_i32 = arith.constant 0 : i32
    %c0_i32_0 = arith.constant 0 : i32
    return %arg0, %c0_i32 : i32, i32
  }
}

</mosaic_0001>

<llo_original>
// kernel: tpu_custom_call.1
$region0: #{tpu_custom_call.1}
  #allocation0 [shape = 'u32[]', space=smem, size = 0x4, offset = 0x4, fixed_abs, tag = 'smem constant byte address 0x4 - core index']
  #allocation1 [shape = 'u32[72,128]{1,0:T(1,128)}', space=vmem, size = 0x9000, scoped, tag = 'internal scratch']
  %s0 = inlined_call_operand.vmem [shape: bf16[16,192], index: 0, kind: input, shape index: {}]
  %s1 = inlined_call_operand.vmem [shape: bf16[64,48], index: 1, kind: input, shape index: {}]
  %s2 = inlined_call_operand.hbm [shape: bf16[192,256], index: 2, kind: input, shape index: {}]
  %s3 = inlined_call_operand.vmem [shape: f32[1,256], index: 3, kind: input, shape index: {}]
  %s4 = inlined_call_operand.vmem [shape: bf16[48,128], index: 4, kind: input, shape index: {}]
  %s5 = inlined_call_operand.vmem [shape: f32[1,128], index: 5, kind: input, shape index: {}]
  %s6 = inlined_call_operand.hbm [shape: bf16[16,256], index: 6, kind: output, shape index: {0}]
  %s7 = inlined_call_operand.hbm [shape: bf16[64,128], index: 7, kind: output, shape index: {1}]
  %8 = xla_tuple %s6, %s7
  %s9 = sld [smem:[#allocation0]]
  $region46: #{tpu_custom_call.1} parent=0
    _
  %s11 = ssub.s32 1, %s9
  %s12 = scalar_select 0, %s11, %s9
  $region1: #{tpu_custom_call.1} parent=0
    #allocation2 [shape = 'u8[98304]{0}', space=vmem, size = 0x18000, scoped, tag = 'input window, operand 2, single buffered']
    #allocation3 [shape = 's32[1]{0}', space=sflag, size = 0x4, scoped, tag = 'scoped memory for tpu_custom_call.1']
    #allocation4 [shape = 's32[1]{0}', space=sflag, size = 0x4, scoped, tag = 'scoped memory for tpu_custom_call.1']
    #allocation5 [shape = 'u8[8192]{0}', space=vmem, size = 0x2000, scoped, tag = 'output window, operand 0, single buffered']
    #allocation6 [shape = 'u8[16384]{0}', space=vmem, size = 0x4000, scoped, tag = 'output window, operand 1, single buffered']
    #allocation7 [shape = 's32[1]{0}', space=sflag, size = 0x4, scoped, tag = 'scoped memory for tpu_custom_call.1']
    %13 = vsyncpa [#allocation3], 0
    %14 = vsyncpa [#allocation4], 0
    %15 = vsyncpa [#allocation7], 0
    // Predicated region
    $region2: #{tpu_custom_call.1} parent=1 // pred_check
      _
    $region3: #{tpu_custom_call.1} parent=1 // pred_check_branch
      %17 = sbr.rel (0) target = $region5
    $region4: #{tpu_custom_call.1} parent=1 // pred_region
      _
    $region5: #{tpu_custom_call.1} parent=1 // pred_fallthru
      _
    // Predicated region
    $region6: #{tpu_custom_call.1} parent=1 // pred_check
      _
    $region7: #{tpu_custom_call.1} parent=1 // pred_check_branch
      %19 = sbr.rel (0) target = $region9
    $region8: #{tpu_custom_call.1} parent=1 // pred_region
      _
    $region9: #{tpu_custom_call.1} parent=1 // pred_fallthru
      _
    // Predicated region
    $region10: #{tpu_custom_call.1} parent=1 // pred_check
      _
    $region11: #{tpu_custom_call.1} parent=1 // pred_check_branch
      %21 = sbr.rel (0) target = $region13
    $region12: #{tpu_custom_call.1} parent=1 // pred_region
      %23 = vsyncadd [#allocation3], 0
      %s24 = sshll.u32 %s2, 4
      %s25 = int_to_ptr.hbm [resolvable:$true] %s24
      %s26 = sshll.u32 [#allocation2], 4
      %s27 = int_to_ptr.vmem [resolvable:$true] %s26
      %32 = dma.hbm_to_vmem [thread:$0]  %s25, 3072, %s27, [#allocation3], 128, 128, 8
    $region13: #{tpu_custom_call.1} parent=1 // pred_fallthru
      _
    // Predicated region
    $region14: #{tpu_custom_call.1} parent=1 // pred_check
      _
    $region15: #{tpu_custom_call.1} parent=1 // pred_check_branch
      %34 = sbr.rel (0) target = $region17
    $region16: #{tpu_custom_call.1} parent=1 // pred_region
      _
    $region17: #{tpu_custom_call.1} parent=1 // pred_fallthru
      _
    // Predicated region
    $region18: #{tpu_custom_call.1} parent=1 // pred_check
      _
    $region19: #{tpu_custom_call.1} parent=1 // pred_check_branch
      %36 = sbr.rel (0) target = $region21
    $region20: #{tpu_custom_call.1} parent=1 // pred_region
      _
    $region21: #{tpu_custom_call.1} parent=1 // pred_fallthru
      _
    // Predicated region
    $region22: #{tpu_custom_call.1} parent=1 // pred_check
      _
    $region23: #{tpu_custom_call.1} parent=1 // pred_check_branch
      %38 = sbr.rel (0) target = $region25
    $region24: #{tpu_custom_call.1} parent=1 // pred_region
      _
    $region25: #{tpu_custom_call.1} parent=1 // pred_fallthru
      _
    // Predicated region
    $region26: #{tpu_custom_call.1} parent=1 // pred_check
      _
    $region27: #{tpu_custom_call.1} parent=1 // pred_check_branch
      %40 = sbr.rel (0) target = $region29
    $region28: #{tpu_custom_call.1} parent=1 // pred_region
      %42 = dma.done [#allocation3], 3072
    $region29: #{tpu_custom_call.1} parent=1 // pred_fallthru
      _
    %v44 = vld [vmem:[%s0] sm:$0xff]
    %v45 = vld [vmem:[%s0 + $0x8] sm:$0xff]
    %v46 = vld [vmem:[#allocation2] sm:$0xff]
    %v47 = vld [vmem:[#allocation2 + $0x8] sm:$0xff]
    %v48 = vld [vmem:[#allocation2 + $0x10] sm:$0xff]
    %v49 = vld [vmem:[#allocation2 + $0x18] sm:$0xff]
    %v50 = vld [vmem:[#allocation2 + $0x20] sm:$0xff]
    %v51 = vld [vmem:[#allocation2 + $0x28] sm:$0xff]
    %v52 = vld [vmem:[#allocation2 + $0x30] sm:$0xff]
    %v53 = vld [vmem:[#allocation2 + $0x38] sm:$0xff]
    %v54 = vld [vmem:[#allocation2 + $0x40] sm:$0xff]
    %v55 = vld [vmem:[#allocation2 + $0x48] sm:$0xff]
    %v56 = vld [vmem:[#allocation2 + $0x50] sm:$0xff]
    %v57 = vld [vmem:[#allocation2 + $0x58] sm:$0xff]
    %v58 = vld [vmem:[#allocation2 + $0x60] sm:$0xff]
    %v59 = vld [vmem:[#allocation2 + $0x68] sm:$0xff]
    %v60 = vld [vmem:[#allocation2 + $0x70] sm:$0xff]
    %v61 = vld [vmem:[#allocation2 + $0x78] sm:$0xff]
    %v62 = vld [vmem:[#allocation2 + $0x80] sm:$0xff]
    %v63 = vld [vmem:[#allocation2 + $0x88] sm:$0xff]
    %v64 = vld [vmem:[#allocation2 + $0x90] sm:$0xff]
    %v65 = vld [vmem:[#allocation2 + $0x98] sm:$0xff]
    %v66 = vld [vmem:[#allocation2 + $0xa0] sm:$0xff]
    %v67 = vld [vmem:[#allocation2 + $0xa8] sm:$0xff]
    %v68 = vld [vmem:[#allocation2 + $0xb0] sm:$0xff]
    %v69 = vld [vmem:[#allocation2 + $0xb8] sm:$0xff]
    %v70 = vld [vmem:[%s3] sm:$0x3]
    %v72 = vperm.slane %v70, 0
    %v73 = vperm.slane %v70, 1
    %v78 = vunpack.c.l.b16 %v44
    %v79 = vunpack.c.h.b16 %v44
    %v80 = vunpack.c.l.b16 %v45
    %v81 = vunpack.c.h.b16 %v45
    %v82 = vpack.c.b16 %v80, %v78
    %v83 = vpack.c.b16 %v81, %v79
    %v109 = vunpack.c.l.b16 %v46
    %v110 = vunpack.c.h.b16 %v46
    %v111 = vunpack.c.l.b16 %v47
    %v112 = vunpack.c.h.b16 %v47
    %v113 = vunpack.c.l.b16 %v48
    %v114 = vunpack.c.h.b16 %v48
    %v115 = vunpack.c.l.b16 %v49
    %v116 = vunpack.c.h.b16 %v49
    %v117 = vunpack.c.l.b16 %v50
    %v118 = vunpack.c.h.b16 %v50
    %v119 = vunpack.c.l.b16 %v51
    %v120 = vunpack.c.h.b16 %v51
    %v121 = vunpack.c.l.b16 %v52
    %v122 = vunpack.c.h.b16 %v52
    %v123 = vunpack.c.l.b16 %v53
    %v124 = vunpack.c.h.b16 %v53
    %v125 = vunpack.c.l.b16 %v54
    %v126 = vunpack.c.h.b16 %v54
    %v127 = vunpack.c.l.b16 %v55
    %v128 = vunpack.c.h.b16 %v55
    %v129 = vunpack.c.l.b16 %v56
    %v130 = vunpack.c.h.b16 %v56
    %v131 = vunpack.c.l.b16 %v57
    %v132 = vunpack.c.h.b16 %v57
    %v133 = vunpack.c.l.b16 %v58
    %v134 = vunpack.c.h.b16 %v58
    %v135 = vunpack.c.l.b16 %v59
    %v136 = vunpack.c.h.b16 %v59
    %v137 = vunpack.c.l.b16 %v60
    %v138 = vunpack.c.h.b16 %v60
    %v139 = vunpack.c.l.b16 %v61
    %v140 = vunpack.c.h.b16 %v61
    %v141 = vunpack.c.l.b16 %v62
    %v142 = vunpack.c.h.b16 %v62
    %v143 = vunpack.c.l.b16 %v63
    %v144 = vunpack.c.h.b16 %v63
    %v145 = vunpack.c.l.b16 %v64
    %v146 = vunpack.c.h.b16 %v64
    %v147 = vunpack.c.l.b16 %v65
    %v148 = vunpack.c.h.b16 %v65
    %v149 = vunpack.c.l.b16 %v66
    %v150 = vunpack.c.h.b16 %v66
    %v151 = vunpack.c.l.b16 %v67
    %v152 = vunpack.c.h.b16 %v67
    %v153 = vunpack.c.l.b16 %v68
    %v154 = vunpack.c.h.b16 %v68
    %v155 = vunpack.c.l.b16 %v69
    %v156 = vunpack.c.h.b16 %v69
    %v157 = vpack.c.b16 %v111, %v109
    %v158 = vpack.c.b16 %v112, %v110
    %v159 = vpack.c.b16 %v115, %v113
    %v160 = vpack.c.b16 %v116, %v114
    %v161 = vpack.c.b16 %v119, %v117
    %v162 = vpack.c.b16 %v120, %v118
    %v163 = vpack.c.b16 %v123, %v121
    %v164 = vpack.c.b16 %v124, %v122
    %v165 = vpack.c.b16 %v127, %v125
    %v166 = vpack.c.b16 %v128, %v126
    %v167 = vpack.c.b16 %v131, %v129
    %v168 = vpack.c.b16 %v132, %v130
    %v169 = vpack.c.b16 %v135, %v133
    %v170 = vpack.c.b16 %v136, %v134
    %v171 = vpack.c.b16 %v139, %v137
    %v172 = vpack.c.b16 %v140, %v138
    %v173 = vpack.c.b16 %v143, %v141
    %v174 = vpack.c.b16 %v144, %v142
    %v175 = vpack.c.b16 %v147, %v145
    %v176 = vpack.c.b16 %v148, %v146
    %v177 = vpack.c.b16 %v151, %v149
    %v178 = vpack.c.b16 %v152, %v150
    %v179 = vpack.c.b16 %v155, %v153
    %v180 = vpack.c.b16 %v156, %v154
    %vm205 = vcmask 523264
    %v207 = vsel %vm205, %v83, 0
    %209 = vmatpush.bf16.msra.mxu0 %v171
    %210 = vmatpush.bf16.msra.mxu0 %v169
    %211 = vmatpush.bf16.msra.mxu0 %v167
    %212 = vmatpush.bf16.msra.mxu0 %v165
    %213 = vmatpush.bf16.msra.mxu0 %v163
    %214 = vmatpush.bf16.msra.mxu0 %v161
    %215 = vmatpush.bf16.msra.mxu0 %v159
    %216 = vmatpush.bf16.msra.mxu0 %v157
    %217 = vmatmul.bf16.gmra.mxu0 %v82
    %v218 = vpop.f32.mrf.mxu0
    %v219 = vadd.f32 %v72, %v218
    %v220 = vpop.f32.mrf.mxu0
    %v221 = vadd.f32 %v72, %v220
    %222 = vdwg.mxu0
    %223 = vmatpush.bf16.msra.mxu0 0
    %224 = vmatpush.bf16.msra.mxu0 0
    %225 = vmatpush.bf16.msra.mxu0 0
    %226 = vmatpush.bf16.msra.mxu0 0
    %227 = vmatpush.bf16.msra.mxu0 %v179
    %228 = vmatpush.bf16.msra.mxu0 %v177
    %229 = vmatpush.bf16.msra.mxu0 %v175
    %230 = vmatpush.bf16.msra.mxu0 %v173
    %231 = vmatmul.bf16.gmra.mxu0 %v207
    %v232 = vpop.f32.mrf.mxu0
    %v233 = vadd.f32 %v219, %v232
    %v234 = vpop.f32.mrf.mxu0
    %v235 = vadd.f32 %v221, %v234
    %236 = vdwg.mxu0
    %237 = vmatpush.bf16.msra.mxu0 %v172
    %238 = vmatpush.bf16.msra.mxu0 %v170
    %239 = vmatpush.bf16.msra.mxu0 %v168
    %240 = vmatpush.bf16.msra.mxu0 %v166
    %241 = vmatpush.bf16.msra.mxu0 %v164
    %242 = vmatpush.bf16.msra.mxu0 %v162
    %243 = vmatpush.bf16.msra.mxu0 %v160
    %244 = vmatpush.bf16.msra.mxu0 %v158
    %245 = vmatmul.bf16.gmra.mxu0 %v82
    %v246 = vpop.f32.mrf.mxu0
    %v247 = vadd.f32 %v73, %v246
    %v248 = vpop.f32.mrf.mxu0
    %v249 = vadd.f32 %v73, %v248
    %250 = vdwg.mxu0
    %251 = vmatpush.bf16.msra.mxu0 0
    %252 = vmatpush.bf16.msra.mxu0 0
    %253 = vmatpush.bf16.msra.mxu0 0
    %254 = vmatpush.bf16.msra.mxu0 0
    %255 = vmatpush.bf16.msra.mxu0 %v180
    %256 = vmatpush.bf16.msra.mxu0 %v178
    %257 = vmatpush.bf16.msra.mxu0 %v176
    %258 = vmatpush.bf16.msra.mxu0 %v174
    %259 = vmatmul.bf16.gmra.mxu0 %v207
    %v260 = vpop.f32.mrf.mxu0
    %v261 = vadd.f32 %v247, %v260
    %v262 = vpop.f32.mrf.mxu0
    %v263 = vadd.f32 %v249, %v262
    %264 = vdwg.mxu0
    %v265 = vmax.f32 %v233, 0.0
    %v266 = vmax.f32 %v261, 0.0
    %v267 = vmax.f32 %v235, 0.0
    %v268 = vmax.f32 %v263, 0.0
    %v269 = vmul.f32 %v265, %v265
    %v270 = vmul.f32 %v266, %v266
    %v271 = vmul.f32 %v267, %v267
    %v272 = vmul.f32 %v268, %v268
    %v273 = vadd.f32 %v269, %v270
    %274 = vadd.xlane.f32.xlu0 %v273
    %v275 = vpop.xlane.xlu0 %274
    %v276 = vadd.f32 %v271, %v272
    %277 = vadd.xlane.f32.xlu0 %v276
    %v278 = vpop.xlane.xlu0 %277
    %v279 = vadd.f32 %v275, 1e-12
    %v280 = vadd.f32 %v278, 1e-12
    %v281 = vrsqrt.pop %v279
    %v282 = vmul.f32 %v281, %v279
    %v283 = vmul.f32 %v282, %v281
    %v284 = vmul.f32 0.5, %v283
    %v285 = vsub.f32 1.5, %v284
    %v286 = vmul.f32 %v281, %v285
    %vm287 = vweird.f32 %v279
    %vm288 = vweird.f32 %v281
    %vm289 = vmor %vm287, %vm288
    %v290 = vsel %vm289, %v281, %v286
    %v291 = vrsqrt.pop %v280
    %v292 = vmul.f32 %v291, %v280
    %v293 = vmul.f32 %v292, %v291
    %v294 = vmul.f32 0.5, %v293
    %v295 = vsub.f32 1.5, %v294
    %v296 = vmul.f32 %v291, %v295
    %vm297 = vweird.f32 %v280
    %vm298 = vweird.f32 %v291
    %vm299 = vmor %vm297, %vm298
    %v300 = vsel %vm299, %v291, %v296
    %v301 = vmul.f32 %v265, %v290
    %v302 = vmul.f32 %v266, %v290
    %v303 = vmul.f32 %v267, %v300
    %v304 = vmul.f32 %v268, %v300
    %v305 = vpack.c.bf16 %v302, %v301
    %v306 = vpack.c.bf16 %v304, %v303
    %307 = vst [vmem:[#allocation5] sm:$0xff] %v305
    %308 = vst [vmem:[#allocation5 + $0x8] sm:$0xff] %v306
    %v309 = vld [vmem:[%s1] sm:$0xf]
    %v310 = vld [vmem:[%s1 + $0x4] sm:$0xf]
    %v311 = vld [vmem:[%s1 + $0x8] sm:$0xf]
    %v312 = vld [vmem:[%s1 + $0xc] sm:$0xf]
    %v313 = vld [vmem:[%s1 + $0x10] sm:$0xf]
    %v314 = vld [vmem:[%s1 + $0x14] sm:$0xf]
    %v315 = vld [vmem:[%s1 + $0x18] sm:$0xf]
    %v316 = vld [vmem:[%s1 + $0x1c] sm:$0xf]
    %v317 = vld [vmem:[%s4] sm:$0xf]
    %v318 = vld [vmem:[%s4 + $0x4] sm:$0xf]
    %v319 = vld [vmem:[%s4 + $0x8] sm:$0xf]
    %v320 = vld [vmem:[%s4 + $0xc] sm:$0xf]
    %v321 = vld [vmem:[%s4 + $0x10] sm:$0xf]
    %v322 = vld [vmem:[%s4 + $0x14] sm:$0xf]
    %v323 = vld [vmem:[%s5] sm:$0x1]
    %v325 = vperm.slane %v323, 0
    %v335 = vunpack.c.l.b16 %v309
    %v336 = vunpack.c.l.b16 %v310
    %v337 = vunpack.c.l.b16 %v311
    %v338 = vunpack.c.l.b16 %v312
    %v339 = vunpack.c.l.b16 %v313
    %v340 = vunpack.c.l.b16 %v314
    %v341 = vunpack.c.l.b16 %v315
    %v342 = vunpack.c.l.b16 %v316
    %v343 = vpack.c.b16 %v336, %v335
    %v344 = vpack.c.b16 %v338, %v337
    %v345 = vpack.c.b16 %v340, %v339
    %v346 = vpack.c.b16 %v342, %v341
    %v353 = vunpack.c.l.b16 %v317
    %v354 = vunpack.c.l.b16 %v318
    %v355 = vunpack.c.l.b16 %v319
    %v356 = vunpack.c.l.b16 %v320
    %v357 = vunpack.c.l.b16 %v321
    %v358 = vunpack.c.l.b16 %v322
    %v359 = vpack.c.b16 %v354, %v353
    %v360 = vpack.c.b16 %v356, %v355
    %v361 = vpack.c.b16 %v358, %v357
    %vm365 = vcmask 392192
    %v367 = vsel %vm365, %v343, 0
    %v370 = vsel %vm365, %v344, 0
    %v373 = vsel %vm365, %v345, 0
    %v376 = vsel %vm365, %v346, 0
    %378 = vmatpush.bf16.msra.mxu0 0
    %379 = vmatpush.bf16.msra.mxu0 0
    %380 = vmatpush.bf16.msra.mxu0 0
    %381 = vmatpush.bf16.msra.mxu0 0
    %382 = vmatpush.bf16.msra.mxu0 0
    %383 = vmatpush.bf16.msra.mxu0 %v361
    %384 = vmatpush.bf16.msra.mxu0 %v360
    %385 = vmatpush.bf16.msra.mxu0 %v359
    %386 = vmatmul.bf16.gmra.mxu0 %v367
    %v387 = vpop.f32.mrf.mxu0
    %v388 = vadd.f32 %v325, %v387
    %v389 = vpop.f32.mrf.mxu0
    %v390 = vadd.f32 %v325, %v389
    %391 = vmatmul.bf16.gmra.mxu0 %v370
    %v392 = vpop.f32.mrf.mxu0
    %v393 = vadd.f32 %v325, %v392
    %v394 = vpop.f32.mrf.mxu0
    %v395 = vadd.f32 %v325, %v394
    %396 = vmatmul.bf16.gmra.mxu0 %v373
    %v397 = vpop.f32.mrf.mxu0
    %v398 = vadd.f32 %v325, %v397
    %v399 = vpop.f32.mrf.mxu0
    %v400 = vadd.f32 %v325, %v399
    %401 = vmatmul.bf16.gmra.mxu0 %v376
    %v402 = vpop.f32.mrf.mxu0
    %v403 = vadd.f32 %v325, %v402
    %v404 = vpop.f32.mrf.mxu0
    %v405 = vadd.f32 %v325, %v404
    %406 = vdwg.mxu0
    %v407 = vmax.f32 %v388, 0.0
    %v408 = vmax.f32 %v390, 0.0
    %v409 = vmax.f32 %v393, 0.0
    %v410 = vmax.f32 %v395, 0.0
    %v411 = vmax.f32 %v398, 0.0
    %v412 = vmax.f32 %v400, 0.0
    %v413 = vmax.f32 %v403, 0.0
    %v414 = vmax.f32 %v405, 0.0
    %v415 = vmul.f32 %v407, %v407
    %v416 = vmul.f32 %v408, %v408
    %v417 = vmul.f32 %v409, %v409
    %v418 = vmul.f32 %v410, %v410
    %v419 = vmul.f32 %v411, %v411
    %v420 = vmul.f32 %v412, %v412
    %v421 = vmul.f32 %v413, %v413
    %v422 = vmul.f32 %v414, %v414
    %423 = vadd.xlane.f32.xlu0 %v415
    %v424 = vpop.xlane.xlu0 %423
    %425 = vadd.xlane.f32.xlu0 %v416
    %v426 = vpop.xlane.xlu0 %425
    %427 = vadd.xlane.f32.xlu0 %v417
    %v428 = vpop.xlane.xlu0 %427
    %429 = vadd.xlane.f32.xlu0 %v418
    %v430 = vpop.xlane.xlu0 %429
    %431 = vadd.xlane.f32.xlu0 %v419
    %v432 = vpop.xlane.xlu0 %431
    %433 = vadd.xlane.f32.xlu0 %v420
    %v434 = vpop.xlane.xlu0 %433
    %435 = vadd.xlane.f32.xlu0 %v421
    %v436 = vpop.xlane.xlu0 %435
    %437 = vadd.xlane.f32.xlu0 %v422
    %v438 = vpop.xlane.xlu0 %437
    %v439 = vadd.f32 %v424, 1e-12
    %v440 = vadd.f32 %v426, 1e-12
    %v441 = vadd.f32 %v428, 1e-12
    %v442 = vadd.f32 %v430, 1e-12
    %v443 = vadd.f32 %v432, 1e-12
    %v444 = vadd.f32 %v434, 1e-12
    %v445 = vadd.f32 %v436, 1e-12
    %v446 = vadd.f32 %v438, 1e-12
    %v447 = vrsqrt.pop %v439
    %v448 = vmul.f32 %v447, %v439
    %v449 = vmul.f32 %v448, %v447
    %v450 = vmul.f32 0.5, %v449
    %v451 = vsub.f32 1.5, %v450
    %v452 = vmul.f32 %v447, %v451
    %vm453 = vweird.f32 %v439
    %vm454 = vweird.f32 %v447
    %vm455 = vmor %vm453, %vm454
    %v456 = vsel %vm455, %v447, %v452
    %v457 = vrsqrt.pop %v440
    %v458 = vmul.f32 %v457, %v440
    %v459 = vmul.f32 %v458, %v457
    %v460 = vmul.f32 0.5, %v459
    %v461 = vsub.f32 1.5, %v460
    %v462 = vmul.f32 %v457, %v461
    %vm463 = vweird.f32 %v440
    %vm464 = vweird.f32 %v457
    %vm465 = vmor %vm463, %vm464
    %v466 = vsel %vm465, %v457, %v462
    %v467 = vrsqrt.pop %v441
    %v468 = vmul.f32 %v467, %v441
    %v469 = vmul.f32 %v468, %v467
    %v470 = vmul.f32 0.5, %v469
    %v471 = vsub.f32 1.5, %v470
    %v472 = vmul.f32 %v467, %v471
    %vm473 = vweird.f32 %v441
    %vm474 = vweird.f32 %v467
    %vm475 = vmor %vm473, %vm474
    %v476 = vsel %vm475, %v467, %v472
    %v477 = vrsqrt.pop %v442
    %v478 = vmul.f32 %v477, %v442
    %v479 = vmul.f32 %v478, %v477
    %v480 = vmul.f32 0.5, %v479
    %v481 = vsub.f32 1.5, %v480
    %v482 = vmul.f32 %v477, %v481
    %vm483 = vweird.f32 %v442
    %vm484 = vweird.f32 %v477
    %vm485 = vmor %vm483, %vm484
    %v486 = vsel %vm485, %v477, %v482
    %v487 = vrsqrt.pop %v443
    %v488 = vmul.f32 %v487, %v443
    %v489 = vmul.f32 %v488, %v487
    %v490 = vmul.f32 0.5, %v489
    %v491 = vsub.f32 1.5, %v490
    %v492 = vmul.f32 %v487, %v491
    %vm493 = vweird.f32 %v443
    %vm494 = vweird.f32 %v487
    %vm495 = vmor %vm493, %vm494
    %v496 = vsel %vm495, %v487, %v492
    %v497 = vrsqrt.pop %v444
    %v498 = vmul.f32 %v497, %v444
    %v499 = vmul.f32 %v498, %v497
    %v500 = vmul.f32 0.5, %v499
    %v501 = vsub.f32 1.5, %v500
    %v502 = vmul.f32 %v497, %v501
    %vm503 = vweird.f32 %v444
    %vm504 = vweird.f32 %v497
    %vm505 = vmor %vm503, %vm504
    %v506 = vsel %vm505, %v497, %v502
    %v507 = vrsqrt.pop %v445
    %v508 = vmul.f32 %v507, %v445
    %v509 = vmul.f32 %v508, %v507
    %v510 = vmul.f32 0.5, %v509
    %v511 = vsub.f32 1.5, %v510
    %v512 = vmul.f32 %v507, %v511
    %vm513 = vweird.f32 %v445
    %vm514 = vweird.f32 %v507
    %vm515 = vmor %vm513, %vm514
    %v516 = vsel %vm515, %v507, %v512
    %v517 = vrsqrt.pop %v446
    %v518 = vmul.f32 %v517, %v446
    %v519 = vmul.f32 %v518, %v517
    %v520 = vmul.f32 0.5, %v519
    %v521 = vsub.f32 1.5, %v520
    %v522 = vmul.f32 %v517, %v521
    %vm523 = vweird.f32 %v446
    %vm524 = vweird.f32 %v517
    %vm525 = vmor %vm523, %vm524
    %v526 = vsel %vm525, %v517, %v522
    %v527 = vmul.f32 %v407, %v456
    %v528 = vmul.f32 %v408, %v466
    %v529 = vmul.f32 %v409, %v476
    %v530 = vmul.f32 %v410, %v486
    %v531 = vmul.f32 %v411, %v496
    %v532 = vmul.f32 %v412, %v506
    %v533 = vmul.f32 %v413, %v516
    %v534 = vmul.f32 %v414, %v526
    %v535 = vpack.c.bf16 %v527, %v527
    %v536 = vpack.c.bf16 %v528, %v528
    %v537 = vpack.c.bf16 %v529, %v529
    %v538 = vpack.c.bf16 %v530, %v530
    %v539 = vpack.c.bf16 %v531, %v531
    %v540 = vpack.c.bf16 %v532, %v532
    %v541 = vpack.c.bf16 %v533, %v533
    %v542 = vpack.c.bf16 %v534, %v534
    %543 = vst [vmem:[#allocation6] sm:$0xf] %v535
    %544 = vst [vmem:[#allocation6 + $0x4] sm:$0xf] %v536
    %545 = vst [vmem:[#allocation6 + $0x8] sm:$0xf] %v537
    %546 = vst [vmem:[#allocation6 + $0xc] sm:$0xf] %v538
    %547 = vst [vmem:[#allocation6 + $0x10] sm:$0xf] %v539
    %548 = vst [vmem:[#allocation6 + $0x14] sm:$0xf] %v540
    %549 = vst [vmem:[#allocation6 + $0x18] sm:$0xf] %v541
    %550 = vst [vmem:[#allocation6 + $0x1c] sm:$0xf] %v542
    // Predicated region
    $region30: #{tpu_custom_call.1} parent=1 // pred_check
      _
    $region31: #{tpu_custom_call.1} parent=1 // pred_check_branch
      %552 = sbr.rel (0) target = $region33
    $region32: #{tpu_custom_call.1} parent=1 // pred_region
      %554 = vsyncadd [#allocation4], 0
      %s555 = sshll.u32 [#allocation5], 4
      %s556 = int_to_ptr.vmem [resolvable:$true] %s555
      %s557 = sshll.u32 %s6, 4
      %s558 = int_to_ptr.hbm [resolvable:$true] %s557
      %563 = dma.vmem_to_hbm [thread:$0]  %s556, 256, %s558, [#allocation4], 128, 128, 8
    $region33: #{tpu_custom_call.1} parent=1 // pred_fallthru
      _
    // Predicated region
    $region34: #{tpu_custom_call.1} parent=1 // pred_check
      _
    $region35: #{tpu_custom_call.1} parent=1 // pred_check_branch
      %565 = sbr.rel (0) target = $region37
    $region36: #{tpu_custom_call.1} parent=1 // pred_region
      %567 = vsyncadd [#allocation7], 0
      %s568 = sshll.u32 [#allocation6], 4
      %s569 = int_to_ptr.vmem [resolvable:$true] %s568
      %s570 = sshll.u32 %s7, 4
      %s571 = int_to_ptr.hbm [resolvable:$true] %s570
      %576 = dma.vmem_to_hbm [thread:$0]  %s569, 512, %s571, [#allocation7], 64, 64, 4
    $region37: #{tpu_custom_call.1} parent=1 // pred_fallthru
      _
    // Predicated region
    $region38: #{tpu_custom_call.1} parent=1 // pred_check
      _
    $region39: #{tpu_custom_call.1} parent=1 // pred_check_branch
      %578 = sbr.rel (0) target = $region41
    $region40: #{tpu_custom_call.1} parent=1 // pred_region
      %580 = dma.done [#allocation4], 256
    $region41: #{tpu_custom_call.1} parent=1 // pred_fallthru
      _
    // Predicated region
    $region42: #{tpu_custom_call.1} parent=1 // pred_check
      _
    $region43: #{tpu_custom_call.1} parent=1 // pred_check_branch
      %582 = sbr.rel (0) target = $region45
    $region44: #{tpu_custom_call.1} parent=1 // pred_region
      %584 = dma.done [#allocation7], 512
    $region45: #{tpu_custom_call.1} parent=1 // pred_fallthru
      _
    %585 = vsyncpa [#allocation3], 1
    %586 = vsyncpa [#allocation4], 1
    %587 = vsyncpa [#allocation7], 1

</llo_original>
